<compile_context>
chip_gen: v6e
topology: v6e:2x2x1
jax: 0.10.0
libtpu: 0.0.40
codegen_flags: <defaults>
</compile_context>

<pallas_src>
import jax
import jax.numpy as jnp
from jax.experimental import pallas as pl
from jax.experimental.pallas import tpu as pltpu


def _round_up(x: int, m: int) -> int:
    return ((x + m - 1) // m) * m


def linear_kernel(x_ref, w_ref, b_ref, o_ref):
    # x_ref: (tb, H)   w_ref: (H, D_pad)   b_ref: (1, dout)   o_ref: (tb, dout)
    # In-kernel cast (no-op for f32) keeps any low-precision MXU path free of
    # wrapper-side HBM passes; accumulation stays f32 via preferred_element_type.
    x = x_ref[...].astype(w_ref.dtype)
    acc = jnp.dot(x, w_ref[...], preferred_element_type=jnp.float32)
    dout = o_ref.shape[-1]
    o_ref[...] = (acc[:, :dout] + b_ref[...]).astype(o_ref.dtype)


def prepare_q_net_params(weight, bias, compute_dtype=jnp.float32):
    """One-time parameter prep (call at init, NOT per forward step).

    weight: (dout, hidden_dim)   -- PyTorch nn.Linear layout
    bias:   (dout,)

    Returns (w_t_pad, b2d, dout):
      w_t_pad: (hidden_dim, D_pad) in `compute_dtype`, lane-padded to 128
               (MXU-friendly matmul shape; the padding never reaches the
               HBM output).
      b2d:     (1, dout) float32 (unpadded -- added in the f32 epilogue).
    """
    dout, hidden_dim = weight.shape
    d_pad = _round_up(dout, 128)
    w_t_pad = (
        jnp.zeros((hidden_dim, d_pad), compute_dtype)
        .at[:, :dout]
        .set(weight.T.astype(compute_dtype))
    )
    b2d = bias.astype(jnp.float32).reshape(1, dout)
    return w_t_pad, b2d, dout


def q_net_forward(x, w_t_pad, b2d, dout, *, tb_max=1024, target_steps=4):
    """Pallas implementation of Q_Net.forward.

    x:       (B, hidden_dim)
    w_t_pad: (hidden_dim, D_pad)   -- from prepare_q_net_params
    b2d:     (1, dout) float32     -- from prepare_q_net_params
    returns  (B, dout) float32
    """
    B, H = x.shape
    Hw, d_pad = w_t_pad.shape
    assert Hw == H, "hidden_dim mismatch between x and prepared weight"
    assert b2d.shape == (1, dout)

    # Sublane packing of the narrower of x / weight dtypes
    # (f32 -> 8, bf16 -> 16, int8/fp8 -> 32).
    itemsize = min(jnp.dtype(x.dtype).itemsize, jnp.dtype(w_t_pad.dtype).itemsize)
    sub = {4: 8, 2: 16, 1: 32}.get(itemsize, 8)

    # Batch tile: aim for >= target_steps grid steps (DMA/compute pipelining;
    # megacore sharding on v7x), multiple of `sub`, capped at tb_max.  For
    # small B this collapses to a single step, which is fine.
    tb = _round_up(max(1, pl.cdiv(B, max(1, target_steps))), sub)
    tb = min(tb, _round_up(tb_max, sub))
    grid = (pl.cdiv(B, tb),)

    return pl.pallas_call(
        linear_kernel,
        out_shape=jax.ShapeDtypeStruct((B, dout), jnp.float32),
        grid_spec=pltpu.PrefetchScalarGridSpec(
            num_scalar_prefetch=0,
            grid=grid,
            in_specs=[
                # x: streamed per batch tile (last dim = full H is legal).
                pl.BlockSpec((tb, H), lambda i: (i, 0)),
                # weight / bias: constant block index -> VMEM-resident
                # across the whole grid.
                pl.BlockSpec((H, d_pad), lambda i: (0, 0)),
                pl.BlockSpec((1, dout), lambda i: (0, 0)),
            ],
            # Unpadded output: full last dim => contiguous (B, dout) writeback.
            out_specs=pl.BlockSpec((tb, dout), lambda i: (i, 0)),
        ),
        compiler_params=pltpu.CompilerParams(
            # Batch axis is embarrassingly parallel -> both TCs on v7x.
            dimension_semantics=("parallel",),
        ),
    )(x, w_t_pad, b2d)


if __name__ == "__main__":
    # Small shapes consistent with Q_Net(hidden_dim, dout).
    batch, hidden_dim, dout = 8, 32, 4

    key = jax.random.PRNGKey(0)
    kx, kw, kb = jax.random.split(key, 3)

    # Deterministic synthetic parameters (PyTorch nn.Linear shapes / init).
    limit = 1.0 / (hidden_dim ** 0.5)
    weight = jax.random.uniform(kw, (dout, hidden_dim), jnp.float32,
                                minval=-limit, maxval=limit)
    bias = jax.random.uniform(kb, (dout,), jnp.float32,
                              minval=-limit, maxval=limit)
    x = jax.random.normal(kx, (batch, hidden_dim), jnp.float32)

    # One-time parameter prep (hoisted out of the per-step path).  f32 compute
    # here so the tight reference check passes; pass compute_dtype=jnp.bfloat16
    # on v6e/v7x if accuracy allows (x is then cast inside the kernel, not in
    # the wrapper).
    w_t_pad, b2d, d = prepare_q_net_params(weight, bias, jnp.float32)

    fwd = jax.jit(lambda xx: q_net_forward(xx, w_t_pad, b2d, d))
    q = fwd(x)
    jax.block_until_ready(q)

    # Reference check against plain JAX.
    q_ref = x @ weight.T + bias
    assert q.shape == (batch, dout)
    assert jnp.allclose(q, q_ref, atol=1e-5, rtol=1e-5)

    print("KERNEL_OK")
</pallas_src>

<mosaic_0001>
module attributes {stable_mosaic.version = 11 : i64} {
  func.func @linear_kernel(%arg0: i32, %arg1: memref<8x32xf32, #tpu.memory_space<vmem>>, %arg2: memref<32x128xf32, #tpu.memory_space<vmem>>, %arg3: memref<1x4xf32, #tpu.memory_space<vmem>>, %arg4: memref<8x4xf32, #tpu.memory_space<vmem>>) attributes {dimension_semantics = [#tpu.dimension_semantics<parallel>], iteration_bounds = array<i64: 1>, scalar_prefetch = 0 : i64, scratch_operands = 0 : i64, tpu.core_type = #tpu.core_type<tc>, window_params = [{transform_indices = @transform_0, window_bounds = array<i64: 8, 32>}, {pipeline_mode = #tpu.pipeline_mode<synchronous>, transform_indices = @transform_1, window_bounds = array<i64: 32, 128>}, {pipeline_mode = #tpu.pipeline_mode<synchronous>, transform_indices = @transform_2, window_bounds = array<i64: 1, 4>}, {transform_indices = @transform_3, window_bounds = array<i64: 8, 4>}]} {
    %c0 = arith.constant 0 : index
    %c0_0 = arith.constant 0 : index
    %0 = vector.load %arg1[%c0, %c0_0] : memref<8x32xf32, #tpu.memory_space<vmem>>, vector<8x32xf32>
    %c0_1 = arith.constant 0 : index
    %c0_2 = arith.constant 0 : index
    %1 = vector.load %arg2[%c0_1, %c0_2] : memref<32x128xf32, #tpu.memory_space<vmem>>, vector<32x128xf32>
    %cst = arith.constant dense<0.000000e+00> : vector<8x128xf32>
    %2 = tpu.matmul %0, %1, %cst {dimension_numbers = #tpu.dot_dimension_numbers<[1], [0], [0], [1], [0, 0, 1, 1], [], []>} : vector<8x32xf32>, vector<32x128xf32>, vector<8x128xf32> -> vector<8x128xf32>
    %3 = vector.extract_strided_slice %2 {offsets = [0, 0], sizes = [8, 4], strides = [1, 1]} : vector<8x128xf32> to vector<8x4xf32>
    %c0_3 = arith.constant 0 : index
    %c0_4 = arith.constant 0 : index
    %4 = vector.load %arg3[%c0_3, %c0_4] : memref<1x4xf32, #tpu.memory_space<vmem>>, vector<1x4xf32>
    %5 = vector.broadcast %4 : vector<1x4xf32> to vector<8x4xf32>
    %6 = arith.addf %3, %5 : vector<8x4xf32>
    %c0_5 = arith.constant 0 : index
    %c0_6 = arith.constant 0 : index
    %7 = vector.load %arg4[%c0_5, %c0_6] : memref<8x4xf32, #tpu.memory_space<vmem>>, vector<8x4xf32>
    tpu.vector_store %arg4[%c0_5, %c0_6], %6 {strides = array<i32>} : memref<8x4xf32, #tpu.memory_space<vmem>>, vector<8x4xf32>,
    return
  }
  func.func @transform_0(%arg0: i32) -> (i32, i32) {
    %c0_i32 = arith.constant 0 : i32
    %c0_i32_0 = arith.constant 0 : i32
    return %arg0, %c0_i32 : i32, i32
  }
  func.func @transform_1(%arg0: i32) -> (i32, i32) {
    %c0_i32 = arith.constant 0 : i32
    %c0_i32_0 = arith.constant 0 : i32
    %c0_i32_1 = arith.constant 0 : i32
    return %c0_i32, %c0_i32_0 : i32, i32
  }
  func.func @transform_2(%arg0: i32) -> (i32, i32) {
    %c0_i32 = arith.constant 0 : i32
    %c0_i32_0 = arith.constant 0 : i32
    %c0_i32_1 = arith.constant 0 : i32
    return %c0_i32, %c0_i32_0 : i32, i32
  }
  func.func @transform_3(%arg0: i32) -> (i32, i32) {
    %c0_i32 = arith.constant 0 : i32
    %c0_i32_0 = arith.constant 0 : i32
    return %arg0, %c0_i32 : i32, i32
  }
}

</mosaic_0001>

<llo_original>
// kernel: _lambda_.1
$region0: #{_lambda_.1}
  #allocation0 [shape = 'u32[]', space=smem, size = 0x4, offset = 0x4, fixed_abs, tag = 'smem constant byte address 0x4 - core index']
  #allocation1 [shape = 'u32[144,128]{1,0:T(1,128)}', space=vmem, size = 0x12000, scoped, tag = 'internal scratch']
  %s0 = inlined_call_operand.hbm [shape: f32[8,32], index: 0, kind: input, shape index: {}]
  %s1 = inlined_call_operand.hbm [shape: f32[32,128], index: 1, kind: input, shape index: {}]
  %s2 = inlined_call_operand.vmem [shape: f32[1,4], index: 2, kind: input, shape index: {}]
  %s3 = inlined_call_operand.vmem [shape: f32[8,4], index: 3, kind: output, shape index: {}]
  %s4 = sld [smem:[#allocation0]]
  $region30: #{_lambda_.1} parent=0
    _
  %s6 = ssub.s32 1, %s4
  %s7 = scalar_select 0, %s6, %s4
  $region1: #{_lambda_.1} parent=0
    #allocation2 [shape = 'u8[4096]{0}', space=vmem, size = 0x1000, scoped, tag = 'input window, operand 0, single buffered']
    #allocation3 [shape = 's32[1]{0}', space=sflag, size = 0x4, scoped, tag = 'scoped memory for _lambda_.1']
    #allocation4 [shape = 'u8[16384]{0}', space=vmem, size = 0x4000, scoped, tag = 'input window, operand 1, single buffered']
    #allocation5 [shape = 's32[1]{0}', space=sflag, size = 0x4, scoped, tag = 'scoped memory for _lambda_.1']
    %8 = vsyncpa [#allocation3], 0
    %9 = vsyncpa [#allocation5], 0
    // Predicated region
    $region2: #{_lambda_.1} parent=1 // pred_check
      _
    $region3: #{_lambda_.1} parent=1 // pred_check_branch
      %11 = sbr.rel (0) target = $region5
    $region4: #{_lambda_.1} parent=1 // pred_region
      %s13 = ssub.s32 128, 128
      %14 = vsyncadd [#allocation3], %s13
      %s16 = sshll.u32 [#allocation2], 4
      %s17 = int_to_ptr.vmem [resolvable:$true] %s16
      %19 = dma.hbm_to_vmem [thread:$0]  %s0, 128, %s17, [#allocation3]
    $region5: #{_lambda_.1} parent=1 // pred_fallthru
      _
    // Predicated region
    $region6: #{_lambda_.1} parent=1 // pred_check
      _
    $region7: #{_lambda_.1} parent=1 // pred_check_branch
      %21 = sbr.rel (0) target = $region9
    $region8: #{_lambda_.1} parent=1 // pred_region
      %s23 = ssub.s32 512, 512
      %24 = vsyncadd [#allocation5], %s23
      %s25 = sshll.u32 [#allocation4], 4
      %s26 = int_to_ptr.vmem [resolvable:$true] %s25
      %31 = dma.hbm_to_vmem [thread:$0]  %s1, 512, %s26, [#allocation5], 128, 128, 8
    $region9: #{_lambda_.1} parent=1 // pred_fallthru
      _
    // Predicated region
    $region10: #{_lambda_.1} parent=1 // pred_check
      _
    $region11: #{_lambda_.1} parent=1 // pred_check_branch
      %33 = sbr.rel (0) target = $region13
    $region12: #{_lambda_.1} parent=1 // pred_region
      _
    $region13: #{_lambda_.1} parent=1 // pred_fallthru
      _
    // Predicated region
    $region14: #{_lambda_.1} parent=1 // pred_check
      _
    $region15: #{_lambda_.1} parent=1 // pred_check_branch
      %35 = sbr.rel (0) target = $region17
    $region16: #{_lambda_.1} parent=1 // pred_region
      %36 = dma.done [#allocation3], 128
    $region17: #{_lambda_.1} parent=1 // pred_fallthru
      _
    // Predicated region
    $region18: #{_lambda_.1} parent=1 // pred_check
      _
    $region19: #{_lambda_.1} parent=1 // pred_check_branch
      %38 = sbr.rel (0) target = $region21
    $region20: #{_lambda_.1} parent=1 // pred_region
      %39 = dma.done [#allocation5], 512
    $region21: #{_lambda_.1} parent=1 // pred_fallthru
      _
    %v40 = vld [vmem:[#allocation2] sm:$0xff]
    %v41 = vld [vmem:[#allocation4] sm:$0xff]
    %v42 = vld [vmem:[#allocation4 + $0x8] sm:$0xff]
    %v43 = vld [vmem:[#allocation4 + $0x10] sm:$0xff]
    %v44 = vld [vmem:[#allocation4 + $0x18] sm:$0xff]
    %vm45 = vcmask 261120
    %v47 = vsel %vm45, %v40, 0
    %49 = vmatprep.subr.mxu0 0.0
    %50 = vmatpush1.msra.mxu0 0.0
    %51 = vmatprep.subr.mxu0 0.0
    %52 = vmatpush1.msra.mxu0 0.0
    %53 = vmatprep.subr.mxu0 0.0
    %54 = vmatpush1.msra.mxu0 0.0
    %55 = vmatprep.subr.mxu0 0.0
    %56 = vmatpush1.msra.mxu0 0.0
    %57 = vmatprep.subr.mxu0 0.0
    %58 = vmatpush1.msra.mxu0 0.0
    %59 = vmatprep.subr.mxu0 0.0
    %60 = vmatpush1.msra.mxu0 0.0
    %61 = vmatprep.subr.mxu0 0.0
    %62 = vmatpush1.msra.mxu0 0.0
    %63 = vmatprep.subr.mxu0 0.0
    %64 = vmatpush1.msra.mxu0 0.0
    %65 = vmatprep.subr.mxu0 0.0
    %66 = vmatpush1.msra.mxu0 0.0
    %67 = vmatprep.subr.mxu0 0.0
    %68 = vmatpush1.msra.mxu0 0.0
    %69 = vmatprep.subr.mxu0 0.0
    %70 = vmatpush1.msra.mxu0 0.0
    %71 = vmatprep.subr.mxu0 0.0
    %72 = vmatpush1.msra.mxu0 0.0
    %73 = vmatprep.subr.mxu0 0.0
    %74 = vmatpush1.msra.mxu0 %v44
    %75 = vmatprep.subr.mxu0 0.0
    %76 = vmatpush1.msra.mxu0 %v43
    %77 = vmatprep.subr.mxu0 0.0
    %78 = vmatpush1.msra.mxu0 %v42
    %79 = vmatprep.subr.mxu0 0.0
    %80 = vmatpush1.msra.mxu0 %v41
    %81 = vmatprep.subr.mxu0 0.0
    %82 = vmatpush2.msra.mxu0 0.0
    %83 = vmatprep.subr.mxu0 0.0
    %84 = vmatpush2.msra.mxu0 0.0
    %85 = vmatprep.subr.mxu0 0.0
    %86 = vmatpush2.msra.mxu0 0.0
    %87 = vmatprep.subr.mxu0 0.0
    %88 = vmatpush2.msra.mxu0 0.0
    %89 = vmatprep.subr.mxu0 0.0
    %90 = vmatpush2.msra.mxu0 0.0
    %91 = vmatprep.subr.mxu0 0.0
    %92 = vmatpush2.msra.mxu0 0.0
    %93 = vmatprep.subr.mxu0 0.0
    %94 = vmatpush2.msra.mxu0 0.0
    %95 = vmatprep.subr.mxu0 0.0
    %96 = vmatpush2.msra.mxu0 0.0
    %97 = vmatprep.subr.mxu0 0.0
    %98 = vmatpush2.msra.mxu0 0.0
    %99 = vmatprep.subr.mxu0 0.0
    %100 = vmatpush2.msra.mxu0 0.0
    %101 = vmatprep.subr.mxu0 0.0
    %102 = vmatpush2.msra.mxu0 0.0
    %103 = vmatprep.subr.mxu0 0.0
    %104 = vmatpush2.msra.mxu0 0.0
    %105 = vmatprep.subr.mxu0 0.0
    %106 = vmatpush2.msra.mxu0 0.0
    %107 = vmatprep.subr.mxu0 0.0
    %108 = vmatpush2.msra.mxu0 0.0
    %109 = vmatprep.subr.mxu0 0.0
    %110 = vmatpush2.msra.mxu0 0.0
    %111 = vmatprep.subr.mxu0 0.0
    %112 = vmatpush2.msra.mxu0 0.0
    %113 = vmatprep.mubr.f32.mxu0 0.0
    %114 = vmatmul.mubr.f32.gmra.mxu0 %v47
    %v115 = vpop.f32.mrf.mxu0
    %v116 = vadd.f32 0.0, %v115
    %v117 = vpop.f32.mrf.mxu0
    %118 = vdwg.mxu0
    %v119 = vld [vmem:[%s2] sm:$0x1]
    %v121 = vlaneseq
    %v122 = vshrl.u32 %v121, 7
    %v123 = vsub.s32 0, %v122
    %v124 = vrot.slane %v119, %v123
    %v126 = vadd.f32 %v116, %v124
    %vm127 = vcmask 31744
    %128 = vst.msk [vmem:[%s3] sm:$0xff] %vm127, %v126
    // Predicated region
    $region22: #{_lambda_.1} parent=1 // pred_check
      _
    $region23: #{_lambda_.1} parent=1 // pred_check_branch
      %130 = sbr.rel (0) target = $region25
    $region24: #{_lambda_.1} parent=1 // pred_region
      _
    $region25: #{_lambda_.1} parent=1 // pred_fallthru
      _
    // Predicated region
    $region26: #{_lambda_.1} parent=1 // pred_check
      _
    $region27: #{_lambda_.1} parent=1 // pred_check_branch
      %132 = sbr.rel (0) target = $region29
    $region28: #{_lambda_.1} parent=1 // pred_region
      _
    $region29: #{_lambda_.1} parent=1 // pred_fallthru
      _
    %133 = vsyncpa [#allocation3], 1
    %134 = vsyncpa [#allocation5], 1

</llo_original>
